<compile_context>
chip_gen: v6e
topology: v6e:2x2x1
jax: 0.10.0
libtpu: 0.0.40
codegen_flags: <defaults>
</compile_context>

<pallas_src>
import jax
import jax.numpy as jnp
from jax.experimental import pallas as pl
from jax.experimental.pallas import tpu as pltpu


def attention_block_kernel(g_ref, x_ref, wg_ref, wx_ref, b_ref, wpsi_ref,
                           bpsi_ref, out_ref):
    # g_ref   : (bN, F_g, tp)  pixel tile of gating signal (native dtype)
    # x_ref   : (bN, F_l, tp)  pixel tile of skip features (native dtype)
    # wg_ref  : (F_int, F_g)   W_g conv weight, BN scale folded (stream dtype)
    # wx_ref  : (F_int, F_l)   W_x conv weight, BN scale folded (stream dtype)
    # b_ref   : (F_int, 1)     pre-summed folded BN shifts (f32)
    # wpsi_ref: (F_int, 1)     psi conv weight, BN scale folded (f32)
    # bpsi_ref: SMEM (1,)      psi folded BN shift (scalar, f32)
    # out_ref : (bN, F_l, tp)
    wg = wg_ref[...]
    wx = wx_ref[...]
    bias = b_ref[...]
    wpsi = wpsi_ref[...]
    bpsi = bpsi_ref[0]

    for b in range(g_ref.shape[0]):      # static sub-batch, unrolled
        g_tile = g_ref[b]                # (F_g, tp), no upcast
        x_tile = x_ref[b]                # (F_l, tp), no upcast

        # 1x1 convs as channel matmuls; f32 accumulation on the MXU.
        g1 = jnp.dot(wg, g_tile, preferred_element_type=jnp.float32)
        x1 = jnp.dot(wx, x_tile, preferred_element_type=jnp.float32)

        # pre-summed folded-BN shift broadcast over lanes, then ReLU (VPU).
        a = jnp.maximum(g1 + x1 + bias, 0.0)

        # psi: F_int -> 1 (sublane reduce on the XLU), shift, sigmoid (EUP).
        p = jnp.sum(a * wpsi, axis=0, keepdims=True) + bpsi        # (1, tp)
        psi = jax.nn.sigmoid(p)

        # gate the skip features; lane-dense store, cast only at the store.
        out_ref[b] = (x_tile * psi).astype(out_ref.dtype)


# ----------------------------------------------------------------------------
# Tiling / wrapper
# ----------------------------------------------------------------------------

def _vmem_capacity_bytes(default=64 * 1024 * 1024):
    """VMEM per TensorCore; conservative (v7x) default if the query fails."""
    try:
        return int(pltpu.get_tpu_info().vmem_capacity_bytes)
    except Exception:
        return default


def _choose_tiling(N, F_g, F_l, F_int, HW, itemsize, budget, weights_bytes,
                   tp_cap, target_step_bytes):
    """Pick (pixel tile, batch elements per grid step) from the VMEM budget."""
    stream_per_px = (F_g + 2 * F_l) * itemsize      # g in + x in + out
    interm_per_px = 4 * F_int * 4                   # f32 g1/x1/a/psi temps
    per_px = 2 * stream_per_px + interm_per_px      # streams double-buffered
    avail = max(budget - weights_bytes, per_px * 128)
    tp = int(min(tp_cap, max((avail // per_px) // 128 * 128, 128)))
    if HW <= tp:
        tp = HW                                      # full spatial extent
        per_b = HW * per_px
        bN = min(N,
                 max(1, target_step_bytes // max(HW * stream_per_px, 1)),
                 max(1, avail // max(per_b, 1)))
        return tp, int(max(1, bN))
    return tp, 1


def _attention_block(g, x, folded, *, tp_cap, target_step_bytes,
                     single_buffer_consts, input_buffer_count):
    N, F_g, H, W = g.shape
    _, F_l, _, _ = x.shape
    F_int = folded["wg"].shape[0]
    HW = H * W
    itemsize = jnp.dtype(x.dtype).itemsize

    # Generation-aware VMEM budget (v7x: 64 MiB/TC, v5e/v6e: 128 MiB).
    capacity = _vmem_capacity_bytes()
    vmem_limit = int(0.75 * capacity)
    budget = int(0.9 * vmem_limit)

    w_copies = 1 if single_buffer_consts else 2
    weights_bytes = w_copies * (F_int * (F_g + F_l) * itemsize
                                + (2 * F_int + 1) * 4)

    tp, bN = _choose_tiling(N, F_g, F_l, F_int, HW, itemsize, budget,
                            weights_bytes, tp_cap, target_step_bytes)

    # NCHW -> (N, C, H*W) is a free (contiguous) reshape -- no transpose pass.
    g3 = g.reshape(N, F_g, HW)
    x3 = x.reshape(N, F_l, HW)

    # Weights ride in the streaming dtype so bf16 callers hit the bf16 MXU;
    # shifts and psi math stay f32.
    wg = folded["wg"].astype(x.dtype)
    wx = folded["wx"].astype(x.dtype)
    bias = folded["b"].astype(jnp.float32)
    wpsi = folded["wpsi"].astype(jnp.float32)
    bpsi = folded["bpsi"].astype(jnp.float32)

    grid = (pl.cdiv(N, bN), pl.cdiv(HW, tp))

    def pix_spec(C):
        kw = {}
        if input_buffer_count is not None:
            kw["pipeline_mode"] = pl.Buffered(input_buffer_count)
        return pl.BlockSpec((bN, C, tp), lambda n, j: (n, 0, j), **kw)

    def const_spec(shape):
        kw = {}
        if single_buffer_consts:
            kw["pipeline_mode"] = pl.Buffered(1)    # constant across the grid
        return pl.BlockSpec(shape, lambda n, j: (0, 0), **kw)

    out3 = pl.pallas_call(
        attention_block_kernel,
        out_shape=jax.ShapeDtypeStruct((N, F_l, HW), x.dtype),
        grid_spec=pltpu.PrefetchScalarGridSpec(
            num_scalar_prefetch=0,
            grid=grid,
            in_specs=[
                pix_spec(F_g),                  # g pixel tile
                pix_spec(F_l),                  # x pixel tile
                const_spec((F_int, F_g)),       # W_g (scale-folded)
                const_spec((F_int, F_l)),       # W_x (scale-folded)
                const_spec((F_int, 1)),         # pre-summed BN shifts
                const_spec((F_int, 1)),         # psi weight (scale-folded)
                pl.BlockSpec(memory_space=pltpu.MemorySpace.SMEM),  # psi shift
            ],
            out_specs=pl.BlockSpec((bN, F_l, tp), lambda n, j: (n, 0, j)),
        ),
        compiler_params=pltpu.CompilerParams(
            dimension_semantics=("parallel", "parallel"),
            vmem_limit_bytes=vmem_limit,
        ),
    )(g3, x3, wg, wx, bias, wpsi, bpsi)

    return out3.reshape(N, F_l, H, W)


def attention_block(g, x, folded, *, tp_cap=2048, target_step_bytes=1 << 20,
                    input_buffer_count=None):
    """g: (N, F_g, H, W), x: (N, F_l, H, W)  ->  (N, F_l, H, W)."""
    try:
        return _attention_block(g, x, folded, tp_cap=tp_cap,
                                target_step_bytes=target_step_bytes,
                                single_buffer_consts=True,
                                input_buffer_count=input_buffer_count)
    except Exception:
        # Fallback if the installed jax rejects BlockSpec(pipeline_mode=...):
        # default double-buffered constants, everything else identical.
        return _attention_block(g, x, folded, tp_cap=tp_cap,
                                target_step_bytes=target_step_bytes,
                                single_buffer_consts=False,
                                input_buffer_count=None)


# ----------------------------------------------------------------------------
# Parameter construction / BN folding (eval-mode) and pure-JAX reference.
# ----------------------------------------------------------------------------

def make_params(key, F_g, F_l, F_int):
    """Raw params mirroring the PyTorch module (conv weight (C_out, C_in))."""
    ks = jax.random.split(key, 9)

    def bn(k, C):
        k1, k2, k3, k4 = jax.random.split(k, 4)
        return {
            "gamma": 1.0 + 0.1 * jax.random.normal(k1, (C,), jnp.float32),
            "beta": 0.1 * jax.random.normal(k2, (C,), jnp.float32),
            "mean": 0.1 * jax.random.normal(k3, (C,), jnp.float32),
            "var": jax.random.uniform(k4, (C,), jnp.float32,
                                      minval=0.5, maxval=1.5),
        }

    return {
        "wg_w": jax.random.normal(ks[0], (F_int, F_g), jnp.float32) * 0.2,
        "wg_b": jax.random.normal(ks[1], (F_int,), jnp.float32) * 0.1,
        "wx_w": jax.random.normal(ks[2], (F_int, F_l), jnp.float32) * 0.2,
        "wx_b": jax.random.normal(ks[3], (F_int,), jnp.float32) * 0.1,
        "wpsi_w": jax.random.normal(ks[4], (1, F_int), jnp.float32) * 0.2,
        "wpsi_b": jax.random.normal(ks[5], (1,), jnp.float32) * 0.1,
        "bn_g": bn(ks[6], F_int),
        "bn_x": bn(ks[7], F_int),
        "bn_psi": bn(ks[8], 1),
    }


def fold_params(p, eps=1e-5):
    """Fold conv bias + eval-mode BN into (scaled weight, shift); pre-sum the
    two branch shifts so the kernel does a single bias add."""
    def fold(w, b, bn):
        s = bn["gamma"] / jnp.sqrt(bn["var"] + eps)
        return w * s[:, None], s * (b - bn["mean"]) + bn["beta"]

    wg_f, bg = fold(p["wg_w"], p["wg_b"], p["bn_g"])
    wx_f, bx = fold(p["wx_w"], p["wx_b"], p["bn_x"])
    wpsi_f, bpsi = fold(p["wpsi_w"], p["wpsi_b"], p["bn_psi"])
    return {
        "wg": wg_f,                       # (F_int, F_g)
        "wx": wx_f,                       # (F_int, F_l)
        "b": (bg + bx)[:, None],          # (F_int, 1) pre-summed shift
        "wpsi": wpsi_f.reshape(-1, 1),    # (F_int, 1)
        "bpsi": bpsi.reshape(1),          # (1,) scalar shift -> SMEM
    }


def reference(g, x, p, eps=1e-5):
    """Pure-JAX reference using the *raw* (unfolded) parameters."""
    N, F_g, H, W = g.shape
    F_l = x.shape[1]

    def conv_bn(inp, w, b, bn):
        y = jnp.einsum("oc,ncp->nop", w, inp) + b[None, :, None]
        s = bn["gamma"] / jnp.sqrt(bn["var"] + eps)
        return (s[None, :, None] * (y - bn["mean"][None, :, None])
                + bn["beta"][None, :, None])

    g3 = g.reshape(N, F_g, H * W)
    x3 = x.reshape(N, F_l, H * W)
    g1 = conv_bn(g3, p["wg_w"], p["wg_b"], p["bn_g"])
    x1 = conv_bn(x3, p["wx_w"], p["wx_b"], p["bn_x"])
    a = jnp.maximum(g1 + x1, 0.0)
    psi = jax.nn.sigmoid(conv_bn(a, p["wpsi_w"], p["wpsi_b"], p["bn_psi"]))
    return (x3 * psi).reshape(N, F_l, H, W)


if __name__ == "__main__":
    key = jax.random.PRNGKey(0)
    k_g, k_x, k_p, k_g2, k_x2, k_p2 = jax.random.split(key, 6)

    # 1) Primary small f32 test (HW fits one tile -> batched-N grid step).
    N, F_g, F_l, F_int, H, W = 2, 4, 4, 8, 16, 16
    g = jax.random.normal(k_g, (N, F_g, H, W), jnp.float32)
    x = jax.random.normal(k_x, (N, F_l, H, W), jnp.float32)
    raw = make_params(k_p, F_g, F_l, F_int)
    folded = fold_params(raw)

    out = jax.block_until_ready(attention_block(g, x, folded))
    ref = reference(g, x, raw)
    assert out.shape == (N, F_l, H, W)
    assert jnp.allclose(out, ref, atol=1e-5, rtol=1e-5), "f32 mismatch"

    # 2) Ragged-tail test: H*W not divisible by the pixel tile (cdiv + mask).
    N2, Fg2, Fl2, Fi2, H2, W2 = 1, 4, 4, 8, 20, 20   # HW=400, tile=256
    g2 = jax.random.normal(k_g2, (N2, Fg2, H2, W2), jnp.float32)
    x2 = jax.random.normal(k_x2, (N2, Fl2, H2, W2), jnp.float32)
    raw2 = make_params(k_p2, Fg2, Fl2, Fi2)
    folded2 = fold_params(raw2)

    out2 = jax.block_until_ready(attention_block(g2, x2, folded2, tp_cap=256))
    ref2 = reference(g2, x2, raw2)
    assert jnp.allclose(out2, ref2, atol=1e-5, rtol=1e-5), "ragged mismatch"

    # 3) bf16 streams: native-dtype I/O + bf16 MXU path, f32 accumulation.
    gb = g.astype(jnp.bfloat16)
    xb = x.astype(jnp.bfloat16)
    outb = jax.block_until_ready(attention_block(gb, xb, folded))
    refb = reference(gb.astype(jnp.float32), xb.astype(jnp.float32), raw)
    assert outb.dtype == jnp.bfloat16
    assert jnp.allclose(outb.astype(jnp.float32), refb,
                        atol=3e-2, rtol=3e-2), "bf16 mismatch"

    print("KERNEL_OK")
</pallas_src>

<mosaic_0001>
module attributes {stable_mosaic.version = 11 : i64} {
  func.func @attention_block_kernel(%arg0: i32, %arg1: i32, %arg2: memref<2x4x256xf32, #tpu.memory_space<vmem>>, %arg3: memref<2x4x256xf32, #tpu.memory_space<vmem>>, %arg4: memref<8x4xf32, #tpu.memory_space<vmem>>, %arg5: memref<8x4xf32, #tpu.memory_space<vmem>>, %arg6: memref<8x1xf32, #tpu.memory_space<vmem>>, %arg7: memref<8x1xf32, #tpu.memory_space<vmem>>, %arg8: memref<1xf32, #tpu.memory_space<smem>>, %arg9: memref<2x4x256xf32, #tpu.memory_space<vmem>>) attributes {dimension_semantics = [#tpu.dimension_semantics<parallel>, #tpu.dimension_semantics<parallel>], iteration_bounds = array<i64: 1, 1>, scalar_prefetch = 0 : i64, scratch_operands = 0 : i64, tpu.core_type = #tpu.core_type<tc>, window_params = [{transform_indices = @transform_0, window_bounds = array<i64: 2, 4, 256>}, {transform_indices = @transform_1, window_bounds = array<i64: 2, 4, 256>}, {pipeline_mode = #tpu.pipeline_mode<synchronous>, transform_indices = @transform_2, window_bounds = array<i64: 8, 4>}, {pipeline_mode = #tpu.pipeline_mode<synchronous>, transform_indices = @transform_3, window_bounds = array<i64: 8, 4>}, {pipeline_mode = #tpu.pipeline_mode<synchronous>, transform_indices = @transform_4, window_bounds = array<i64: 8, 1>}, {pipeline_mode = #tpu.pipeline_mode<synchronous>, transform_indices = @transform_5, window_bounds = array<i64: 8, 1>}, {transform_indices = @transform_6, window_bounds = array<i64: 1>}, {transform_indices = @transform_7, window_bounds = array<i64: 2, 4, 256>}]} {
    %c0 = arith.constant 0 : index
    %c0_0 = arith.constant 0 : index
    %0 = vector.load %arg4[%c0, %c0_0] : memref<8x4xf32, #tpu.memory_space<vmem>>, vector<8x4xf32>
    %c0_1 = arith.constant 0 : index
    %c0_2 = arith.constant 0 : index
    %1 = vector.load %arg5[%c0_1, %c0_2] : memref<8x4xf32, #tpu.memory_space<vmem>>, vector<8x4xf32>
    %c0_3 = arith.constant 0 : index
    %c0_4 = arith.constant 0 : index
    %2 = vector.load %arg6[%c0_3, %c0_4] : memref<8x1xf32, #tpu.memory_space<vmem>>, vector<8x1xf32>
    %c0_5 = arith.constant 0 : index
    %c0_6 = arith.constant 0 : index
    %3 = vector.load %arg7[%c0_5, %c0_6] : memref<8x1xf32, #tpu.memory_space<vmem>>, vector<8x1xf32>
    %c0_7 = arith.constant 0 : index
    %4 = memref.load %arg8[%c0_7] : memref<1xf32, #tpu.memory_space<smem>>
    %c0_8 = arith.constant 0 : index
    %c0_9 = arith.constant 0 : index
    %c0_10 = arith.constant 0 : index
    %5 = vector.load %arg2[%c0_8, %c0_9, %c0_10] : memref<2x4x256xf32, #tpu.memory_space<vmem>>, vector<1x4x256xf32>
    %6 = vector.shape_cast %5 : vector<1x4x256xf32> to vector<4x256xf32>
    %c0_11 = arith.constant 0 : index
    %c0_12 = arith.constant 0 : index
    %c0_13 = arith.constant 0 : index
    %7 = vector.load %arg3[%c0_11, %c0_12, %c0_13] : memref<2x4x256xf32, #tpu.memory_space<vmem>>, vector<1x4x256xf32>
    %8 = vector.shape_cast %7 : vector<1x4x256xf32> to vector<4x256xf32>
    %cst = arith.constant dense<0.000000e+00> : vector<8x256xf32>
    %9 = tpu.matmul %0, %6, %cst {dimension_numbers = #tpu.dot_dimension_numbers<[1], [0], [0], [1], [0, 0, 1, 1], [], []>} : vector<8x4xf32>, vector<4x256xf32>, vector<8x256xf32> -> vector<8x256xf32>
    %cst_14 = arith.constant dense<0.000000e+00> : vector<8x256xf32>
    %10 = tpu.matmul %1, %8, %cst_14 {dimension_numbers = #tpu.dot_dimension_numbers<[1], [0], [0], [1], [0, 0, 1, 1], [], []>} : vector<8x4xf32>, vector<4x256xf32>, vector<8x256xf32> -> vector<8x256xf32>
    %11 = arith.addf %9, %10 : vector<8x256xf32>
    %12 = vector.broadcast %2 : vector<8x1xf32> to vector<8x256xf32>
    %13 = arith.addf %11, %12 : vector<8x256xf32>
    %cst_15 = arith.constant 0.000000e+00 : f32
    %14 = vector.broadcast %cst_15 : f32 to vector<8x256xf32>
    %15 = arith.maximumf %13, %14 : vector<8x256xf32>
    %16 = vector.broadcast %3 : vector<8x1xf32> to vector<8x256xf32>
    %17 = arith.mulf %15, %16 : vector<8x256xf32>
    %cst_16 = arith.constant dense<0.000000e+00> : vector<256xf32>
    %18 = vector.multi_reduction <add>, %17, %cst_16 [0] : vector<8x256xf32> to vector<256xf32>
    %19 = vector.shape_cast %18 : vector<256xf32> to vector<1x256xf32>
    %20 = vector.broadcast %4 : f32 to vector<1x256xf32>
    %21 = arith.addf %19, %20 : vector<1x256xf32>
    %22 = arith.negf %21 : vector<1x256xf32>
    %23 = math.exp %22 : vector<1x256xf32>
    %cst_17 = arith.constant 1.000000e+00 : f32
    %24 = vector.broadcast %cst_17 : f32 to vector<1x256xf32>
    %25 = arith.addf %24, %23 : vector<1x256xf32>
    %26 = arith.divf %24, %25 : vector<1x256xf32>
    %27 = vector.broadcast %26 : vector<1x256xf32> to vector<4x256xf32>
    %28 = arith.mulf %8, %27 : vector<4x256xf32>
    %c0_18 = arith.constant 0 : index
    %c0_19 = arith.constant 0 : index
    %c0_20 = arith.constant 0 : index
    %29 = vector.load %arg9[%c0_18, %c0_19, %c0_20] : memref<2x4x256xf32, #tpu.memory_space<vmem>>, vector<1x4x256xf32>
    %30 = vector.shape_cast %29 : vector<1x4x256xf32> to vector<4x256xf32>
    %31 = vector.shape_cast %28 : vector<4x256xf32> to vector<1x4x256xf32>
    tpu.vector_store %arg9[%c0_18, %c0_19, %c0_20], %31 {strides = array<i32>} : memref<2x4x256xf32, #tpu.memory_space<vmem>>, vector<1x4x256xf32>,
    %c1 = arith.constant 1 : index
    %c0_21 = arith.constant 0 : index
    %c0_22 = arith.constant 0 : index
    %32 = vector.load %arg2[%c1, %c0_21, %c0_22] : memref<2x4x256xf32, #tpu.memory_space<vmem>>, vector<1x4x256xf32>
    %33 = vector.shape_cast %32 : vector<1x4x256xf32> to vector<4x256xf32>
    %c1_23 = arith.constant 1 : index
    %c0_24 = arith.constant 0 : index
    %c0_25 = arith.constant 0 : index
    %34 = vector.load %arg3[%c1_23, %c0_24, %c0_25] : memref<2x4x256xf32, #tpu.memory_space<vmem>>, vector<1x4x256xf32>
    %35 = vector.shape_cast %34 : vector<1x4x256xf32> to vector<4x256xf32>
    %cst_26 = arith.constant dense<0.000000e+00> : vector<8x256xf32>
    %36 = tpu.matmul %0, %33, %cst_26 {dimension_numbers = #tpu.dot_dimension_numbers<[1], [0], [0], [1], [0, 0, 1, 1], [], []>} : vector<8x4xf32>, vector<4x256xf32>, vector<8x256xf32> -> vector<8x256xf32>
    %cst_27 = arith.constant dense<0.000000e+00> : vector<8x256xf32>
    %37 = tpu.matmul %1, %35, %cst_27 {dimension_numbers = #tpu.dot_dimension_numbers<[1], [0], [0], [1], [0, 0, 1, 1], [], []>} : vector<8x4xf32>, vector<4x256xf32>, vector<8x256xf32> -> vector<8x256xf32>
    %38 = arith.addf %36, %37 : vector<8x256xf32>
    %39 = vector.broadcast %2 : vector<8x1xf32> to vector<8x256xf32>
    %40 = arith.addf %38, %39 : vector<8x256xf32>
    %cst_28 = arith.constant 0.000000e+00 : f32
    %41 = vector.broadcast %cst_28 : f32 to vector<8x256xf32>
    %42 = arith.maximumf %40, %41 : vector<8x256xf32>
    %43 = vector.broadcast %3 : vector<8x1xf32> to vector<8x256xf32>
    %44 = arith.mulf %42, %43 : vector<8x256xf32>
    %cst_29 = arith.constant dense<0.000000e+00> : vector<256xf32>
    %45 = vector.multi_reduction <add>, %44, %cst_29 [0] : vector<8x256xf32> to vector<256xf32>
    %46 = vector.shape_cast %45 : vector<256xf32> to vector<1x256xf32>
    %47 = vector.broadcast %4 : f32 to vector<1x256xf32>
    %48 = arith.addf %46, %47 : vector<1x256xf32>
    %49 = arith.negf %48 : vector<1x256xf32>
    %50 = math.exp %49 : vector<1x256xf32>
    %cst_30 = arith.constant 1.000000e+00 : f32
    %51 = vector.broadcast %cst_30 : f32 to vector<1x256xf32>
    %52 = arith.addf %51, %50 : vector<1x256xf32>
    %53 = arith.divf %51, %52 : vector<1x256xf32>
    %54 = vector.broadcast %53 : vector<1x256xf32> to vector<4x256xf32>
    %55 = arith.mulf %35, %54 : vector<4x256xf32>
    %c1_31 = arith.constant 1 : index
    %c0_32 = arith.constant 0 : index
    %c0_33 = arith.constant 0 : index
    %56 = vector.load %arg9[%c1_31, %c0_32, %c0_33] : memref<2x4x256xf32, #tpu.memory_space<vmem>>, vector<1x4x256xf32>
    %57 = vector.shape_cast %56 : vector<1x4x256xf32> to vector<4x256xf32>
    %58 = vector.shape_cast %55 : vector<4x256xf32> to vector<1x4x256xf32>
    tpu.vector_store %arg9[%c1_31, %c0_32, %c0_33], %58 {strides = array<i32>} : memref<2x4x256xf32, #tpu.memory_space<vmem>>, vector<1x4x256xf32>,
    return
  }
  func.func @transform_0(%arg0: i32, %arg1: i32) -> (i32, i32, i32) {
    %c0_i32 = arith.constant 0 : i32
    %c0_i32_0 = arith.constant 0 : i32
    return %arg0, %c0_i32, %arg1 : i32, i32, i32
  }
  func.func @transform_1(%arg0: i32, %arg1: i32) -> (i32, i32, i32) {
    %c0_i32 = arith.constant 0 : i32
    %c0_i32_0 = arith.constant 0 : i32
    return %arg0, %c0_i32, %arg1 : i32, i32, i32
  }
  func.func @transform_2(%arg0: i32, %arg1: i32) -> (i32, i32) {
    %c0_i32 = arith.constant 0 : i32
    %c0_i32_0 = arith.constant 0 : i32
    %c0_i32_1 = arith.constant 0 : i32
    return %c0_i32, %c0_i32_0 : i32, i32
  }
  func.func @transform_3(%arg0: i32, %arg1: i32) -> (i32, i32) {
    %c0_i32 = arith.constant 0 : i32
    %c0_i32_0 = arith.constant 0 : i32
    %c0_i32_1 = arith.constant 0 : i32
    return %c0_i32, %c0_i32_0 : i32, i32
  }
  func.func @transform_4(%arg0: i32, %arg1: i32) -> (i32, i32) {
    %c0_i32 = arith.constant 0 : i32
    %c0_i32_0 = arith.constant 0 : i32
    %c0_i32_1 = arith.constant 0 : i32
    return %c0_i32, %c0_i32_0 : i32, i32
  }
  func.func @transform_5(%arg0: i32, %arg1: i32) -> (i32, i32) {
    %c0_i32 = arith.constant 0 : i32
    %c0_i32_0 = arith.constant 0 : i32
    %c0_i32_1 = arith.constant 0 : i32
    return %c0_i32, %c0_i32_0 : i32, i32
  }
  func.func @transform_6(%arg0: i32, %arg1: i32) -> i32 {
    %c0_i32 = arith.constant 0 : i32
    %c0_i32_0 = arith.constant 0 : i32
    return %c0_i32 : i32
  }
  func.func @transform_7(%arg0: i32, %arg1: i32) -> (i32, i32, i32) {
    %c0_i32 = arith.constant 0 : i32
    %c0_i32_0 = arith.constant 0 : i32
    return %arg0, %c0_i32, %arg1 : i32, i32, i32
  }
}

module attributes {stable_mosaic.version = 11 : i64} {
  func.func @attention_block_kernel(%arg0: i32, %arg1: i32, %arg2: memref<2x4x256xf32, #tpu.memory_space<vmem>>, %arg3: memref<2x4x256xf32, #tpu.memory_space<vmem>>, %arg4: memref<8x4xf32, #tpu.memory_space<vmem>>, %arg5: memref<8x4xf32, #tpu.memory_space<vmem>>, %arg6: memref<8x1xf32, #tpu.memory_space<vmem>>, %arg7: memref<8x1xf32, #tpu.memory_space<vmem>>, %arg8: memref<1xf32, #tpu.memory_space<smem>>, %arg9: memref<2x4x256xf32, #tpu.memory_space<vmem>>) attributes {dimension_semantics = [#tpu.dimension_semantics<parallel>, #tpu.dimension_semantics<parallel>], iteration_bounds = array<i64: 1, 1>, scalar_prefetch = 0 : i64, scratch_operands = 0 : i64, tpu.core_type = #tpu.core_type<tc>, window_params = [{transform_indices = @transform_0, window_bounds = array<i64: 2, 4, 256>}, {transform_indices = @transform_1, window_bounds = array<i64: 2, 4, 256>}, {pipeline_mode = #tpu.pipeline_mode<synchronous>, transform_indices = @transform_2, window_bounds = array<i64: 8, 4>}, {pipeline_mode = #tpu.pipeline_mode<synchronous>, transform_indices = @transform_3, window_bounds = array<i64: 8, 4>}, {pipeline_mode = #tpu.pipeline_mode<synchronous>, transform_indices = @transform_4, window_bounds = array<i64: 8, 1>}, {pipeline_mode = #tpu.pipeline_mode<synchronous>, transform_indices = @transform_5, window_bounds = array<i64: 8, 1>}, {transform_indices = @transform_6, window_bounds = array<i64: 1>}, {transform_indices = @transform_7, window_bounds = array<i64: 2, 4, 256>}]} {
    %c0 = arith.constant 0 : index
    %c0_0 = arith.constant 0 : index
    %0 = vector.load %arg4[%c0, %c0_0] : memref<8x4xf32, #tpu.memory_space<vmem>>, vector<8x4xf32>
    %c0_1 = arith.constant 0 : index
    %c0_2 = arith.constant 0 : index
    %1 = vector.load %arg5[%c0_1, %c0_2] : memref<8x4xf32, #tpu.memory_space<vmem>>, vector<8x4xf32>
    %c0_3 = arith.constant 0 : index
    %c0_4 = arith.constant 0 : index
    %2 = vector.load %arg6[%c0_3, %c0_4] : memref<8x1xf32, #tpu.memory_space<vmem>>, vector<8x1xf32>
    %c0_5 = arith.constant 0 : index
    %c0_6 = arith.constant 0 : index
    %3 = vector.load %arg7[%c0_5, %c0_6] : memref<8x1xf32, #tpu.memory_space<vmem>>, vector<8x1xf32>
    %c0_7 = arith.constant 0 : index
    %4 = memref.load %arg8[%c0_7] : memref<1xf32, #tpu.memory_space<smem>>
    %c0_8 = arith.constant 0 : index
    %c0_9 = arith.constant 0 : index
    %c0_10 = arith.constant 0 : index
    %5 = vector.load %arg2[%c0_8, %c0_9, %c0_10] : memref<2x4x256xf32, #tpu.memory_space<vmem>>, vector<1x4x256xf32>
    %6 = vector.shape_cast %5 : vector<1x4x256xf32> to vector<4x256xf32>
    %c0_11 = arith.constant 0 : index
    %c0_12 = arith.constant 0 : index
    %c0_13 = arith.constant 0 : index
    %7 = vector.load %arg3[%c0_11, %c0_12, %c0_13] : memref<2x4x256xf32, #tpu.memory_space<vmem>>, vector<1x4x256xf32>
    %8 = vector.shape_cast %7 : vector<1x4x256xf32> to vector<4x256xf32>
    %cst = arith.constant dense<0.000000e+00> : vector<8x256xf32>
    %9 = tpu.matmul %0, %6, %cst {dimension_numbers = #tpu.dot_dimension_numbers<[1], [0], [0], [1], [0, 0, 1, 1], [], []>} : vector<8x4xf32>, vector<4x256xf32>, vector<8x256xf32> -> vector<8x256xf32>
    %cst_14 = arith.constant dense<0.000000e+00> : vector<8x256xf32>
    %10 = tpu.matmul %1, %8, %cst_14 {dimension_numbers = #tpu.dot_dimension_numbers<[1], [0], [0], [1], [0, 0, 1, 1], [], []>} : vector<8x4xf32>, vector<4x256xf32>, vector<8x256xf32> -> vector<8x256xf32>
    %11 = arith.addf %9, %10 : vector<8x256xf32>
    %12 = vector.broadcast %2 : vector<8x1xf32> to vector<8x256xf32>
    %13 = arith.addf %11, %12 : vector<8x256xf32>
    %cst_15 = arith.constant 0.000000e+00 : f32
    %14 = vector.broadcast %cst_15 : f32 to vector<8x256xf32>
    %15 = arith.maximumf %13, %14 : vector<8x256xf32>
    %16 = vector.broadcast %3 : vector<8x1xf32> to vector<8x256xf32>
    %17 = arith.mulf %15, %16 : vector<8x256xf32>
    %cst_16 = arith.constant dense<0.000000e+00> : vector<256xf32>
    %18 = vector.multi_reduction <add>, %17, %cst_16 [0] : vector<8x256xf32> to vector<256xf32>
    %19 = vector.shape_cast %18 : vector<256xf32> to vector<1x256xf32>
    %20 = vector.broadcast %4 : f32 to vector<1x256xf32>
    %21 = arith.addf %19, %20 : vector<1x256xf32>
    %22 = arith.negf %21 : vector<1x256xf32>
    %23 = math.exp %22 : vector<1x256xf32>
    %cst_17 = arith.constant 1.000000e+00 : f32
    %24 = vector.broadcast %cst_17 : f32 to vector<1x256xf32>
    %25 = arith.addf %24, %23 : vector<1x256xf32>
    %26 = arith.divf %24, %25 : vector<1x256xf32>
    %27 = vector.broadcast %26 : vector<1x256xf32> to vector<4x256xf32>
    %28 = arith.mulf %8, %27 : vector<4x256xf32>
    %c0_18 = arith.constant 0 : index
    %c0_19 = arith.constant 0 : index
    %c0_20 = arith.constant 0 : index
    %29 = vector.load %arg9[%c0_18, %c0_19, %c0_20] : memref<2x4x256xf32, #tpu.memory_space<vmem>>, vector<1x4x256xf32>
    %30 = vector.shape_cast %29 : vector<1x4x256xf32> to vector<4x256xf32>
    %31 = vector.shape_cast %28 : vector<4x256xf32> to vector<1x4x256xf32>
    tpu.vector_store %arg9[%c0_18, %c0_19, %c0_20], %31 {strides = array<i32>} : memref<2x4x256xf32, #tpu.memory_space<vmem>>, vector<1x4x256xf32>,
    %c1 = arith.constant 1 : index
    %c0_21 = arith.constant 0 : index
    %c0_22 = arith.constant 0 : index
    %32 = vector.load %arg2[%c1, %c0_21, %c0_22] : memref<2x4x256xf32, #tpu.memory_space<vmem>>, vector<1x4x256xf32>
    %33 = vector.shape_cast %32 : vector<1x4x256xf32> to vector<4x256xf32>
    %c1_23 = arith.constant 1 : index
    %c0_24 = arith.constant 0 : index
    %c0_25 = arith.constant 0 : index
    %34 = vector.load %arg3[%c1_23, %c0_24, %c0_25] : memref<2x4x256xf32, #tpu.memory_space<vmem>>, vector<1x4x256xf32>
    %35 = vector.shape_cast %34 : vector<1x4x256xf32> to vector<4x256xf32>
    %cst_26 = arith.constant dense<0.000000e+00> : vector<8x256xf32>
    %36 = tpu.matmul %0, %33, %cst_26 {dimension_numbers = #tpu.dot_dimension_numbers<[1], [0], [0], [1], [0, 0, 1, 1], [], []>} : vector<8x4xf32>, vector<4x256xf32>, vector<8x256xf32> -> vector<8x256xf32>
    %cst_27 = arith.constant dense<0.000000e+00> : vector<8x256xf32>
    %37 = tpu.matmul %1, %35, %cst_27 {dimension_numbers = #tpu.dot_dimension_numbers<[1], [0], [0], [1], [0, 0, 1, 1], [], []>} : vector<8x4xf32>, vector<4x256xf32>, vector<8x256xf32> -> vector<8x256xf32>
    %38 = arith.addf %36, %37 : vector<8x256xf32>
    %39 = vector.broadcast %2 : vector<8x1xf32> to vector<8x256xf32>
    %40 = arith.addf %38, %39 : vector<8x256xf32>
    %cst_28 = arith.constant 0.000000e+00 : f32
    %41 = vector.broadcast %cst_28 : f32 to vector<8x256xf32>
    %42 = arith.maximumf %40, %41 : vector<8x256xf32>
    %43 = vector.broadcast %3 : vector<8x1xf32> to vector<8x256xf32>
    %44 = arith.mulf %42, %43 : vector<8x256xf32>
    %cst_29 = arith.constant dense<0.000000e+00> : vector<256xf32>
    %45 = vector.multi_reduction <add>, %44, %cst_29 [0] : vector<8x256xf32> to vector<256xf32>
    %46 = vector.shape_cast %45 : vector<256xf32> to vector<1x256xf32>
    %47 = vector.broadcast %4 : f32 to vector<1x256xf32>
    %48 = arith.addf %46, %47 : vector<1x256xf32>
    %49 = arith.negf %48 : vector<1x256xf32>
    %50 = math.exp %49 : vector<1x256xf32>
    %cst_30 = arith.constant 1.000000e+00 : f32
    %51 = vector.broadcast %cst_30 : f32 to vector<1x256xf32>
    %52 = arith.addf %51, %50 : vector<1x256xf32>
    %53 = arith.divf %51, %52 : vector<1x256xf32>
    %54 = vector.broadcast %53 : vector<1x256xf32> to vector<4x256xf32>
    %55 = arith.mulf %35, %54 : vector<4x256xf32>
    %c1_31 = arith.constant 1 : index
    %c0_32 = arith.constant 0 : index
    %c0_33 = arith.constant 0 : index
    %56 = vector.load %arg9[%c1_31, %c0_32, %c0_33] : memref<2x4x256xf32, #tpu.memory_space<vmem>>, vector<1x4x256xf32>
    %57 = vector.shape_cast %56 : vector<1x4x256xf32> to vector<4x256xf32>
    %58 = vector.shape_cast %55 : vector<4x256xf32> to vector<1x4x256xf32>
    tpu.vector_store %arg9[%c1_31, %c0_32, %c0_33], %58 {strides = array<i32>} : memref<2x4x256xf32, #tpu.memory_space<vmem>>, vector<1x4x256xf32>,
    return
  }
  func.func @transform_0(%arg0: i32, %arg1: i32) -> (i32, i32, i32) {
    %c0_i32 = arith.constant 0 : i32
    %c0_i32_0 = arith.constant 0 : i32
    return %arg0, %c0_i32, %arg1 : i32, i32, i32
  }
  func.func @transform_1(%arg0: i32, %arg1: i32) -> (i32, i32, i32) {
    %c0_i32 = arith.constant 0 : i32
    %c0_i32_0 = arith.constant 0 : i32
    return %arg0, %c0_i32, %arg1 : i32, i32, i32
  }
  func.func @transform_2(%arg0: i32, %arg1: i32) -> (i32, i32) {
    %c0_i32 = arith.constant 0 : i32
    %c0_i32_0 = arith.constant 0 : i32
    %c0_i32_1 = arith.constant 0 : i32
    return %c0_i32, %c0_i32_0 : i32, i32
  }
  func.func @transform_3(%arg0: i32, %arg1: i32) -> (i32, i32) {
    %c0_i32 = arith.constant 0 : i32
    %c0_i32_0 = arith.constant 0 : i32
    %c0_i32_1 = arith.constant 0 : i32
    return %c0_i32, %c0_i32_0 : i32, i32
  }
  func.func @transform_4(%arg0: i32, %arg1: i32) -> (i32, i32) {
    %c0_i32 = arith.constant 0 : i32
    %c0_i32_0 = arith.constant 0 : i32
    %c0_i32_1 = arith.constant 0 : i32
    return %c0_i32, %c0_i32_0 : i32, i32
  }
  func.func @transform_5(%arg0: i32, %arg1: i32) -> (i32, i32) {
    %c0_i32 = arith.constant 0 : i32
    %c0_i32_0 = arith.constant 0 : i32
    %c0_i32_1 = arith.constant 0 : i32
    return %c0_i32, %c0_i32_0 : i32, i32
  }
  func.func @transform_6(%arg0: i32, %arg1: i32) -> i32 {
    %c0_i32 = arith.constant 0 : i32
    %c0_i32_0 = arith.constant 0 : i32
    return %c0_i32 : i32
  }
  func.func @transform_7(%arg0: i32, %arg1: i32) -> (i32, i32, i32) {
    %c0_i32 = arith.constant 0 : i32
    %c0_i32_0 = arith.constant 0 : i32
    return %arg0, %c0_i32, %arg1 : i32, i32, i32
  }
}

</mosaic_0001>

<llo_original>
// kernel: tpu_custom_call.1
$region0: #{tpu_custom_call.1}
  #allocation0 [shape = 'u32[]', space=smem, size = 0x4, offset = 0x4, fixed_abs, tag = 'smem constant byte address 0x4 - core index']
  #allocation1 [shape = 'u32[144,128]{1,0:T(1,128)}', space=vmem, size = 0x12000, scoped, tag = 'internal scratch']
  #allocation2 [shape = 'f32[1]{0:T(128)S(6)}', space=smem, size = 0x200, scoped, tag = 'scoped memory for tpu_custom_call.1']
  %s0 = inlined_call_operand.vmem [shape: f32[2,4,256], index: 0, kind: input, shape index: {}]
  %s1 = inlined_call_operand.vmem [shape: f32[2,4,256], index: 1, kind: input, shape index: {}]
  %s2 = inlined_call_operand.vmem [shape: f32[8,4], index: 2, kind: input, shape index: {}]
  %s3 = inlined_call_operand.vmem [shape: f32[8,4], index: 3, kind: input, shape index: {}]
  %s4 = inlined_call_operand.vmem [shape: f32[8,1], index: 4, kind: input, shape index: {}]
  %s5 = inlined_call_operand.vmem [shape: f32[8,1], index: 5, kind: input, shape index: {}]
  %s6 = inlined_call_operand.<no memory space> [shape: f32[1], index: 6, kind: input, shape index: {}]
  %s7 = inlined_call_operand.hbm [shape: f32[2,4,256], index: 7, kind: output, shape index: {}]
  %s8 = sld [smem:[#allocation0]]
  $region38: #{tpu_custom_call.1} parent=0
    _
  %s10 = ssub.s32 1, %s8
  %s11 = scalar_select 0, %s10, %s8
  %12 = sst [smem:[#allocation2]] %s6
  $region1: #{tpu_custom_call.1} parent=0
    #allocation3 [shape = 'u8[8192]{0}', space=vmem, size = 0x2000, scoped, tag = 'output window, operand 0, single buffered']
    #allocation4 [shape = 's32[1]{0}', space=sflag, size = 0x4, scoped, tag = 'scoped memory for tpu_custom_call.1']
    %13 = vsyncpa [#allocation4], 0
    // Predicated region
    $region2: #{tpu_custom_call.1} parent=1 // pred_check
      _
    $region3: #{tpu_custom_call.1} parent=1 // pred_check_branch
      %15 = sbr.rel (0) target = $region5
    $region4: #{tpu_custom_call.1} parent=1 // pred_region
      _
    $region5: #{tpu_custom_call.1} parent=1 // pred_fallthru
      _
    // Predicated region
    $region6: #{tpu_custom_call.1} parent=1 // pred_check
      _
    $region7: #{tpu_custom_call.1} parent=1 // pred_check_branch
      %17 = sbr.rel (0) target = $region9
    $region8: #{tpu_custom_call.1} parent=1 // pred_region
      _
    $region9: #{tpu_custom_call.1} parent=1 // pred_fallthru
      _
    // Predicated region
    $region10: #{tpu_custom_call.1} parent=1 // pred_check
      _
    $region11: #{tpu_custom_call.1} parent=1 // pred_check_branch
      %19 = sbr.rel (0) target = $region13
    $region12: #{tpu_custom_call.1} parent=1 // pred_region
      _
    $region13: #{tpu_custom_call.1} parent=1 // pred_fallthru
      _
    // Predicated region
    $region14: #{tpu_custom_call.1} parent=1 // pred_check
      _
    $region15: #{tpu_custom_call.1} parent=1 // pred_check_branch
      %21 = sbr.rel (0) target = $region17
    $region16: #{tpu_custom_call.1} parent=1 // pred_region
      _
    $region17: #{tpu_custom_call.1} parent=1 // pred_fallthru
      _
    // Predicated region
    $region18: #{tpu_custom_call.1} parent=1 // pred_check
      _
    $region19: #{tpu_custom_call.1} parent=1 // pred_check_branch
      %23 = sbr.rel (0) target = $region21
    $region20: #{tpu_custom_call.1} parent=1 // pred_region
      _
    $region21: #{tpu_custom_call.1} parent=1 // pred_fallthru
      _
    // Predicated region
    $region22: #{tpu_custom_call.1} parent=1 // pred_check
      _
    $region23: #{tpu_custom_call.1} parent=1 // pred_check_branch
      %25 = sbr.rel (0) target = $region25
    $region24: #{tpu_custom_call.1} parent=1 // pred_region
      _
    $region25: #{tpu_custom_call.1} parent=1 // pred_fallthru
      _
    // Predicated region
    $region26: #{tpu_custom_call.1} parent=1 // pred_check
      _
    $region27: #{tpu_custom_call.1} parent=1 // pred_check_branch
      %27 = sbr.rel (0) target = $region29
    $region28: #{tpu_custom_call.1} parent=1 // pred_region
      _
    $region29: #{tpu_custom_call.1} parent=1 // pred_fallthru
      _
    %v28 = vld [vmem:[%s2] sm:$0xff]
    %v29 = vld [vmem:[%s3] sm:$0xff]
    %v30 = vld [vmem:[%s4] sm:$0xff]
    %v31 = vld [vmem:[%s5] sm:$0xff]
    %s32 = sld [smem:[#allocation2]]
    %v33 = vld [vmem:[%s0] sm:$0xff]
    %v34 = vld [vmem:[%s1] sm:$0xff]
    %v36 = vcombine.high %v34, %v34
    %vm37 = vcmask 31744
    %v39 = vsel %vm37, %v29, 0
    %vm41 = vcmask 1043456
    %v42 = vsel %vm41, %v34, 0
    %v44 = vsel %vm41, %v36, 0
    %46 = vmatprep.subr.mxu0 0.0
    %47 = vmatpush1.msra.mxu0 0.0
    %48 = vmatprep.subr.mxu0 0.0
    %49 = vmatpush1.msra.mxu0 0.0
    %50 = vmatprep.subr.mxu0 0.0
    %51 = vmatpush1.msra.mxu0 0.0
    %52 = vmatprep.subr.mxu0 0.0
    %53 = vmatpush1.msra.mxu0 0.0
    %54 = vmatprep.subr.mxu0 0.0
    %55 = vmatpush1.msra.mxu0 0.0
    %56 = vmatprep.subr.mxu0 0.0
    %57 = vmatpush1.msra.mxu0 0.0
    %58 = vmatprep.subr.mxu0 0.0
    %59 = vmatpush1.msra.mxu0 0.0
    %60 = vmatprep.subr.mxu0 0.0
    %61 = vmatpush1.msra.mxu0 0.0
    %62 = vmatprep.subr.mxu0 0.0
    %63 = vmatpush1.msra.mxu0 0.0
    %64 = vmatprep.subr.mxu0 0.0
    %65 = vmatpush1.msra.mxu0 0.0
    %66 = vmatprep.subr.mxu0 0.0
    %67 = vmatpush1.msra.mxu0 0.0
    %68 = vmatprep.subr.mxu0 0.0
    %69 = vmatpush1.msra.mxu0 0.0
    %70 = vmatprep.subr.mxu0 0.0
    %71 = vmatpush1.msra.mxu0 0.0
    %72 = vmatprep.subr.mxu0 0.0
    %73 = vmatpush1.msra.mxu0 0.0
    %74 = vmatprep.subr.mxu0 0.0
    %75 = vmatpush1.msra.mxu0 0.0
    %76 = vmatprep.subr.mxu0 %v44
    %77 = vmatpush1.msra.mxu0 %v42
    %78 = vmatprep.subr.mxu0 0.0
    %79 = vmatpush2.msra.mxu0 0.0
    %80 = vmatprep.subr.mxu0 0.0
    %81 = vmatpush2.msra.mxu0 0.0
    %82 = vmatprep.subr.mxu0 0.0
    %83 = vmatpush2.msra.mxu0 0.0
    %84 = vmatprep.subr.mxu0 0.0
    %85 = vmatpush2.msra.mxu0 0.0
    %86 = vmatprep.subr.mxu0 0.0
    %87 = vmatpush2.msra.mxu0 0.0
    %88 = vmatprep.subr.mxu0 0.0
    %89 = vmatpush2.msra.mxu0 0.0
    %90 = vmatprep.subr.mxu0 0.0
    %91 = vmatpush2.msra.mxu0 0.0
    %92 = vmatprep.subr.mxu0 0.0
    %93 = vmatpush2.msra.mxu0 0.0
    %94 = vmatprep.subr.mxu0 0.0
    %95 = vmatpush2.msra.mxu0 0.0
    %96 = vmatprep.subr.mxu0 0.0
    %97 = vmatpush2.msra.mxu0 0.0
    %98 = vmatprep.subr.mxu0 0.0
    %99 = vmatpush2.msra.mxu0 0.0
    %100 = vmatprep.subr.mxu0 0.0
    %101 = vmatpush2.msra.mxu0 0.0
    %102 = vmatprep.subr.mxu0 0.0
    %103 = vmatpush2.msra.mxu0 0.0
    %104 = vmatprep.subr.mxu0 0.0
    %105 = vmatpush2.msra.mxu0 0.0
    %106 = vmatprep.subr.mxu0 0.0
    %107 = vmatpush2.msra.mxu0 0.0
    %108 = vmatprep.subr.mxu0 0.0
    %109 = vmatpush2.msra.mxu0 0.0
    %110 = vmatprep.mubr.f32.mxu0 0.0
    %111 = vmatmul.mubr.f32.gmra.mxu0 %v39
    %v112 = vpop.f32.mrf.mxu0
    %v113 = vadd.f32 0.0, %v112
    %v114 = vpop.f32.mrf.mxu0
    %v115 = vadd.f32 0.0, %v114
    %116 = vdwg.mxu0
    %v118 = vcombine.high %v33, %v33
    %v120 = vsel %vm37, %v28, 0
    %v122 = vsel %vm41, %v33, 0
    %v124 = vsel %vm41, %v118, 0
    %126 = vmatprep.subr.mxu0 0.0
    %127 = vmatpush1.msra.mxu0 0.0
    %128 = vmatprep.subr.mxu0 0.0
    %129 = vmatpush1.msra.mxu0 0.0
    %130 = vmatprep.subr.mxu0 0.0
    %131 = vmatpush1.msra.mxu0 0.0
    %132 = vmatprep.subr.mxu0 0.0
    %133 = vmatpush1.msra.mxu0 0.0
    %134 = vmatprep.subr.mxu0 0.0
    %135 = vmatpush1.msra.mxu0 0.0
    %136 = vmatprep.subr.mxu0 0.0
    %137 = vmatpush1.msra.mxu0 0.0
    %138 = vmatprep.subr.mxu0 0.0
    %139 = vmatpush1.msra.mxu0 0.0
    %140 = vmatprep.subr.mxu0 0.0
    %141 = vmatpush1.msra.mxu0 0.0
    %142 = vmatprep.subr.mxu0 0.0
    %143 = vmatpush1.msra.mxu0 0.0
    %144 = vmatprep.subr.mxu0 0.0
    %145 = vmatpush1.msra.mxu0 0.0
    %146 = vmatprep.subr.mxu0 0.0
    %147 = vmatpush1.msra.mxu0 0.0
    %148 = vmatprep.subr.mxu0 0.0
    %149 = vmatpush1.msra.mxu0 0.0
    %150 = vmatprep.subr.mxu0 0.0
    %151 = vmatpush1.msra.mxu0 0.0
    %152 = vmatprep.subr.mxu0 0.0
    %153 = vmatpush1.msra.mxu0 0.0
    %154 = vmatprep.subr.mxu0 0.0
    %155 = vmatpush1.msra.mxu0 0.0
    %156 = vmatprep.subr.mxu0 %v124
    %157 = vmatpush1.msra.mxu0 %v122
    %158 = vmatprep.subr.mxu0 0.0
    %159 = vmatpush2.msra.mxu0 0.0
    %160 = vmatprep.subr.mxu0 0.0
    %161 = vmatpush2.msra.mxu0 0.0
    %162 = vmatprep.subr.mxu0 0.0
    %163 = vmatpush2.msra.mxu0 0.0
    %164 = vmatprep.subr.mxu0 0.0
    %165 = vmatpush2.msra.mxu0 0.0
    %166 = vmatprep.subr.mxu0 0.0
    %167 = vmatpush2.msra.mxu0 0.0
    %168 = vmatprep.subr.mxu0 0.0
    %169 = vmatpush2.msra.mxu0 0.0
    %170 = vmatprep.subr.mxu0 0.0
    %171 = vmatpush2.msra.mxu0 0.0
    %172 = vmatprep.subr.mxu0 0.0
    %173 = vmatpush2.msra.mxu0 0.0
    %174 = vmatprep.subr.mxu0 0.0
    %175 = vmatpush2.msra.mxu0 0.0
    %176 = vmatprep.subr.mxu0 0.0
    %177 = vmatpush2.msra.mxu0 0.0
    %178 = vmatprep.subr.mxu0 0.0
    %179 = vmatpush2.msra.mxu0 0.0
    %180 = vmatprep.subr.mxu0 0.0
    %181 = vmatpush2.msra.mxu0 0.0
    %182 = vmatprep.subr.mxu0 0.0
    %183 = vmatpush2.msra.mxu0 0.0
    %184 = vmatprep.subr.mxu0 0.0
    %185 = vmatpush2.msra.mxu0 0.0
    %186 = vmatprep.subr.mxu0 0.0
    %187 = vmatpush2.msra.mxu0 0.0
    %188 = vmatprep.subr.mxu0 0.0
    %189 = vmatpush2.msra.mxu0 0.0
    %190 = vmatprep.mubr.f32.mxu0 0.0
    %191 = vmatmul.mubr.f32.gmra.mxu0 %v120
    %v192 = vpop.f32.mrf.mxu0
    %v193 = vadd.f32 %v113, %v192
    %v194 = vpop.f32.mrf.mxu0
    %v195 = vadd.f32 %v115, %v194
    %196 = vdwg.mxu0
    %198 = vset.pattern.permute.xlu0 0
    %199 = vperm.xlu0 %198, %v30
    %v200 = vpop.permute.xlu0 %199
    %v202 = vadd.f32 %v193, %v200
    %v203 = vadd.f32 %v195, %v200
    %v204 = vmax.f32 %v202, 0.0
    %v205 = vmax.f32 %v203, 0.0
    %207 = vset.pattern.permute.xlu0 0
    %208 = vperm.xlu0 %207, %v31
    %v209 = vpop.permute.xlu0 %208
    %v211 = vmul.f32 %v204, %v209
    %v212 = vmul.f32 %v205, %v209
    %v213 = vrot.slane %v211, 4
    %v214 = vadd.f32 %v211, %v213
    %v215 = vrot.slane %v214, 2
    %v216 = vadd.f32 %v214, %v215
    %v217 = vrot.slane %v216, 1
    %v218 = vadd.f32 %v216, %v217
    %v219 = vrot.slane %v212, 4
    %v220 = vadd.f32 %v212, %v219
    %v221 = vrot.slane %v220, 2
    %v222 = vadd.f32 %v220, %v221
    %v223 = vrot.slane %v222, 1
    %v224 = vadd.f32 %v222, %v223
    %v225 = vstv %s32
    %v226 = vadd.f32 %v218, %v225
    %v227 = vadd.f32 %v224, %v225
    %v228 = vxor.u32 %v226, 2147483648
    %v229 = vxor.u32 %v227, 2147483648
    %v230 = vmul.f32 %v228, 1.442695
    %v231 = vpow.pop %v230
    %v232 = vmul.f32 %v229, 1.442695
    %v233 = vpow.pop %v232
    %v234 = vadd.f32 %v231, 1.0
    %v235 = vadd.f32 %v233, 1.0
    %v236 = vrcp.pop %v234
    %v237 = vmul.f32 1.0, %v236
    %v238 = vrcp.pop %v235
    %v239 = vmul.f32 1.0, %v238
    %v242 = vcombine.low %v237, %v239
    %v244 = vmul.f32 %v34, %v242
    %245 = vst [vmem:[#allocation3] sm:$0xff] %v244
    %s246 = scalar_lea.vmem %s0, 8
    %v247 = vld [vmem:[%s246] sm:$0xff]
    %s248 = scalar_lea.vmem %s1, 8
    %v249 = vld [vmem:[%s248] sm:$0xff]
    %v251 = vcombine.high %v249, %v249
    %v252 = vsel %vm41, %v249, 0
    %v254 = vsel %vm41, %v251, 0
    %256 = vmatprep.subr.mxu0 0.0
    %257 = vmatpush1.msra.mxu0 0.0
    %258 = vmatprep.subr.mxu0 0.0
    %259 = vmatpush1.msra.mxu0 0.0
    %260 = vmatprep.subr.mxu0 0.0
    %261 = vmatpush1.msra.mxu0 0.0
    %262 = vmatprep.subr.mxu0 0.0
    %263 = vmatpush1.msra.mxu0 0.0
    %264 = vmatprep.subr.mxu0 0.0
    %265 = vmatpush1.msra.mxu0 0.0
    %266 = vmatprep.subr.mxu0 0.0
    %267 = vmatpush1.msra.mxu0 0.0
    %268 = vmatprep.subr.mxu0 0.0
    %269 = vmatpush1.msra.mxu0 0.0
    %270 = vmatprep.subr.mxu0 0.0
    %271 = vmatpush1.msra.mxu0 0.0
    %272 = vmatprep.subr.mxu0 0.0
    %273 = vmatpush1.msra.mxu0 0.0
    %274 = vmatprep.subr.mxu0 0.0
    %275 = vmatpush1.msra.mxu0 0.0
    %276 = vmatprep.subr.mxu0 0.0
    %277 = vmatpush1.msra.mxu0 0.0
    %278 = vmatprep.subr.mxu0 0.0
    %279 = vmatpush1.msra.mxu0 0.0
    %280 = vmatprep.subr.mxu0 0.0
    %281 = vmatpush1.msra.mxu0 0.0
    %282 = vmatprep.subr.mxu0 0.0
    %283 = vmatpush1.msra.mxu0 0.0
    %284 = vmatprep.subr.mxu0 0.0
    %285 = vmatpush1.msra.mxu0 0.0
    %286 = vmatprep.subr.mxu0 %v254
    %287 = vmatpush1.msra.mxu0 %v252
    %288 = vmatprep.subr.mxu0 0.0
    %289 = vmatpush2.msra.mxu0 0.0
    %290 = vmatprep.subr.mxu0 0.0
    %291 = vmatpush2.msra.mxu0 0.0
    %292 = vmatprep.subr.mxu0 0.0
    %293 = vmatpush2.msra.mxu0 0.0
    %294 = vmatprep.subr.mxu0 0.0
    %295 = vmatpush2.msra.mxu0 0.0
    %296 = vmatprep.subr.mxu0 0.0
    %297 = vmatpush2.msra.mxu0 0.0
    %298 = vmatprep.subr.mxu0 0.0
    %299 = vmatpush2.msra.mxu0 0.0
    %300 = vmatprep.subr.mxu0 0.0
    %301 = vmatpush2.msra.mxu0 0.0
    %302 = vmatprep.subr.mxu0 0.0
    %303 = vmatpush2.msra.mxu0 0.0
    %304 = vmatprep.subr.mxu0 0.0
    %305 = vmatpush2.msra.mxu0 0.0
    %306 = vmatprep.subr.mxu0 0.0
    %307 = vmatpush2.msra.mxu0 0.0
    %308 = vmatprep.subr.mxu0 0.0
    %309 = vmatpush2.msra.mxu0 0.0
    %310 = vmatprep.subr.mxu0 0.0
    %311 = vmatpush2.msra.mxu0 0.0
    %312 = vmatprep.subr.mxu0 0.0
    %313 = vmatpush2.msra.mxu0 0.0
    %314 = vmatprep.subr.mxu0 0.0
    %315 = vmatpush2.msra.mxu0 0.0
    %316 = vmatprep.subr.mxu0 0.0
    %317 = vmatpush2.msra.mxu0 0.0
    %318 = vmatprep.subr.mxu0 0.0
    %319 = vmatpush2.msra.mxu0 0.0
    %320 = vmatprep.mubr.f32.mxu0 0.0
    %321 = vmatmul.mubr.f32.gmra.mxu0 %v39
    %v322 = vpop.f32.mrf.mxu0
    %v323 = vadd.f32 0.0, %v322
    %v324 = vpop.f32.mrf.mxu0
    %v325 = vadd.f32 0.0, %v324
    %326 = vdwg.mxu0
    %v328 = vcombine.high %v247, %v247
    %v329 = vsel %vm41, %v247, 0
    %v331 = vsel %vm41, %v328, 0
    %333 = vmatprep.subr.mxu0 0.0
    %334 = vmatpush1.msra.mxu0 0.0
    %335 = vmatprep.subr.mxu0 0.0
    %336 = vmatpush1.msra.mxu0 0.0
    %337 = vmatprep.subr.mxu0 0.0
    %338 = vmatpush1.msra.mxu0 0.0
    %339 = vmatprep.subr.mxu0 0.0
    %340 = vmatpush1.msra.mxu0 0.0
    %341 = vmatprep.subr.mxu0 0.0
    %342 = vmatpush1.msra.mxu0 0.0
    %343 = vmatprep.subr.mxu0 0.0
    %344 = vmatpush1.msra.mxu0 0.0
    %345 = vmatprep.subr.mxu0 0.0
    %346 = vmatpush1.msra.mxu0 0.0
    %347 = vmatprep.subr.mxu0 0.0
    %348 = vmatpush1.msra.mxu0 0.0
    %349 = vmatprep.subr.mxu0 0.0
    %350 = vmatpush1.msra.mxu0 0.0
    %351 = vmatprep.subr.mxu0 0.0
    %352 = vmatpush1.msra.mxu0 0.0
    %353 = vmatprep.subr.mxu0 0.0
    %354 = vmatpush1.msra.mxu0 0.0
    %355 = vmatprep.subr.mxu0 0.0
    %356 = vmatpush1.msra.mxu0 0.0
    %357 = vmatprep.subr.mxu0 0.0
    %358 = vmatpush1.msra.mxu0 0.0
    %359 = vmatprep.subr.mxu0 0.0
    %360 = vmatpush1.msra.mxu0 0.0
    %361 = vmatprep.subr.mxu0 0.0
    %362 = vmatpush1.msra.mxu0 0.0
    %363 = vmatprep.subr.mxu0 %v331
    %364 = vmatpush1.msra.mxu0 %v329
    %365 = vmatprep.subr.mxu0 0.0
    %366 = vmatpush2.msra.mxu0 0.0
    %367 = vmatprep.subr.mxu0 0.0
    %368 = vmatpush2.msra.mxu0 0.0
    %369 = vmatprep.subr.mxu0 0.0
    %370 = vmatpush2.msra.mxu0 0.0
    %371 = vmatprep.subr.mxu0 0.0
    %372 = vmatpush2.msra.mxu0 0.0
    %373 = vmatprep.subr.mxu0 0.0
    %374 = vmatpush2.msra.mxu0 0.0
    %375 = vmatprep.subr.mxu0 0.0
    %376 = vmatpush2.msra.mxu0 0.0
    %377 = vmatprep.subr.mxu0 0.0
    %378 = vmatpush2.msra.mxu0 0.0
    %379 = vmatprep.subr.mxu0 0.0
    %380 = vmatpush2.msra.mxu0 0.0
    %381 = vmatprep.subr.mxu0 0.0
    %382 = vmatpush2.msra.mxu0 0.0
    %383 = vmatprep.subr.mxu0 0.0
    %384 = vmatpush2.msra.mxu0 0.0
    %385 = vmatprep.subr.mxu0 0.0
    %386 = vmatpush2.msra.mxu0 0.0
    %387 = vmatprep.subr.mxu0 0.0
    %388 = vmatpush2.msra.mxu0 0.0
    %389 = vmatprep.subr.mxu0 0.0
    %390 = vmatpush2.msra.mxu0 0.0
    %391 = vmatprep.subr.mxu0 0.0
    %392 = vmatpush2.msra.mxu0 0.0
    %393 = vmatprep.subr.mxu0 0.0
    %394 = vmatpush2.msra.mxu0 0.0
    %395 = vmatprep.subr.mxu0 0.0
    %396 = vmatpush2.msra.mxu0 0.0
    %397 = vmatprep.mubr.f32.mxu0 0.0
    %398 = vmatmul.mubr.f32.gmra.mxu0 %v120
    %v399 = vpop.f32.mrf.mxu0
    %v400 = vadd.f32 %v323, %v399
    %v401 = vpop.f32.mrf.mxu0
    %v402 = vadd.f32 %v325, %v401
    %403 = vdwg.mxu0
    %v404 = vadd.f32 %v400, %v200
    %v405 = vadd.f32 %v402, %v200
    %v406 = vmax.f32 %v404, 0.0
    %v407 = vmax.f32 %v405, 0.0
    %v408 = vmul.f32 %v406, %v209
    %v409 = vmul.f32 %v407, %v209
    %v410 = vrot.slane %v408, 4
    %v411 = vadd.f32 %v408, %v410
    %v412 = vrot.slane %v411, 2
    %v413 = vadd.f32 %v411, %v412
    %v414 = vrot.slane %v413, 1
    %v415 = vadd.f32 %v413, %v414
    %v416 = vrot.slane %v409, 4
    %v417 = vadd.f32 %v409, %v416
    %v418 = vrot.slane %v417, 2
    %v419 = vadd.f32 %v417, %v418
    %v420 = vrot.slane %v419, 1
    %v421 = vadd.f32 %v419, %v420
    %v422 = vadd.f32 %v415, %v225
    %v423 = vadd.f32 %v421, %v225
    %v424 = vxor.u32 %v422, 2147483648
    %v425 = vxor.u32 %v423, 2147483648
    %v426 = vmul.f32 %v424, 1.442695
    %v427 = vpow.pop %v426
    %v428 = vmul.f32 %v425, 1.442695
    %v429 = vpow.pop %v428
    %v430 = vadd.f32 %v427, 1.0
    %v431 = vadd.f32 %v429, 1.0
    %v432 = vrcp.pop %v430
    %v433 = vmul.f32 1.0, %v432
    %v434 = vrcp.pop %v431
    %v435 = vmul.f32 1.0, %v434
    %v438 = vcombine.low %v433, %v435
    %v440 = vmul.f32 %v249, %v438
    %s441 = scalar_lea.vmem [#allocation3], 8
    %442 = vst [vmem:[%s441] sm:$0xff] %v440
    // Predicated region
    $region30: #{tpu_custom_call.1} parent=1 // pred_check
      _
    $region31: #{tpu_custom_call.1} parent=1 // pred_check_branch
      %444 = sbr.rel (0) target = $region33
    $region32: #{tpu_custom_call.1} parent=1 // pred_region
      %s446 = ssub.s32 256, 256
      %447 = vsyncadd [#allocation4], %s446
      %s448 = sshll.u32 [#allocation3], 4
      %s449 = int_to_ptr.vmem [resolvable:$true] %s448
      %454 = dma.vmem_to_hbm [thread:$0]  %s449, 256, %s7, [#allocation4], 128, 128, 8
    $region33: #{tpu_custom_call.1} parent=1 // pred_fallthru
      _
    // Predicated region
    $region34: #{tpu_custom_call.1} parent=1 // pred_check
      _
    $region35: #{tpu_custom_call.1} parent=1 // pred_check_branch
      %456 = sbr.rel (0) target = $region37
    $region36: #{tpu_custom_call.1} parent=1 // pred_region
      %457 = dma.done [#allocation4], 256
    $region37: #{tpu_custom_call.1} parent=1 // pred_fallthru
      _
    %458 = vsyncpa [#allocation4], 1

// kernel: tpu_custom_call.1
$region0: #{tpu_custom_call.1}
  #allocation0 [shape = 'u32[]', space=smem, size = 0x4, offset = 0x4, fixed_abs, tag = 'smem constant byte address 0x4 - core index']
  #allocation1 [shape = 'u32[144,128]{1,0:T(1,128)}', space=vmem, size = 0x12000, scoped, tag = 'internal scratch']
  #allocation2 [shape = 'f32[1]{0:T(128)S(6)}', space=smem, size = 0x200, scoped, tag = 'scoped memory for tpu_custom_call.1']
  %s0 = inlined_call_operand.vmem [shape: f32[2,4,256], index: 0, kind: input, shape index: {}]
  %s1 = inlined_call_operand.vmem [shape: f32[2,4,256], index: 1, kind: input, shape index: {}]
  %s2 = inlined_call_operand.vmem [shape: f32[8,4], index: 2, kind: input, shape index: {}]
  %s3 = inlined_call_operand.vmem [shape: f32[8,4], index: 3, kind: input, shape index: {}]
  %s4 = inlined_call_operand.vmem [shape: f32[8,1], index: 4, kind: input, shape index: {}]
  %s5 = inlined_call_operand.vmem [shape: f32[8,1], index: 5, kind: input, shape index: {}]
  %s6 = inlined_call_operand.<no memory space> [shape: f32[1], index: 6, kind: input, shape index: {}]
  %s7 = inlined_call_operand.hbm [shape: f32[2,4,256], index: 7, kind: output, shape index: {}]
  %s8 = sld [smem:[#allocation0]]
  $region38: #{tpu_custom_call.1} parent=0
    _
  %s10 = ssub.s32 1, %s8
  %s11 = scalar_select 0, %s10, %s8
  %12 = sst [smem:[#allocation2]] %s6
  $region1: #{tpu_custom_call.1} parent=0
    #allocation3 [shape = 'u8[8192]{0}', space=vmem, size = 0x2000, scoped, tag = 'output window, operand 0, single buffered']
    #allocation4 [shape = 's32[1]{0}', space=sflag, size = 0x4, scoped, tag = 'scoped memory for tpu_custom_call.1']
    %13 = vsyncpa [#allocation4], 0
    // Predicated region
    $region2: #{tpu_custom_call.1} parent=1 // pred_check
      _
    $region3: #{tpu_custom_call.1} parent=1 // pred_check_branch
      %15 = sbr.rel (0) target = $region5
    $region4: #{tpu_custom_call.1} parent=1 // pred_region
      _
    $region5: #{tpu_custom_call.1} parent=1 // pred_fallthru
      _
    // Predicated region
    $region6: #{tpu_custom_call.1} parent=1 // pred_check
      _
    $region7: #{tpu_custom_call.1} parent=1 // pred_check_branch
      %17 = sbr.rel (0) target = $region9
    $region8: #{tpu_custom_call.1} parent=1 // pred_region
      _
    $region9: #{tpu_custom_call.1} parent=1 // pred_fallthru
      _
    // Predicated region
    $region10: #{tpu_custom_call.1} parent=1 // pred_check
      _
    $region11: #{tpu_custom_call.1} parent=1 // pred_check_branch
      %19 = sbr.rel (0) target = $region13
    $region12: #{tpu_custom_call.1} parent=1 // pred_region
      _
    $region13: #{tpu_custom_call.1} parent=1 // pred_fallthru
      _
    // Predicated region
    $region14: #{tpu_custom_call.1} parent=1 // pred_check
      _
    $region15: #{tpu_custom_call.1} parent=1 // pred_check_branch
      %21 = sbr.rel (0) target = $region17
    $region16: #{tpu_custom_call.1} parent=1 // pred_region
      _
    $region17: #{tpu_custom_call.1} parent=1 // pred_fallthru
      _
    // Predicated region
    $region18: #{tpu_custom_call.1} parent=1 // pred_check
      _
    $region19: #{tpu_custom_call.1} parent=1 // pred_check_branch
      %23 = sbr.rel (0) target = $region21
    $region20: #{tpu_custom_call.1} parent=1 // pred_region
      _
    $region21: #{tpu_custom_call.1} parent=1 // pred_fallthru
      _
    // Predicated region
    $region22: #{tpu_custom_call.1} parent=1 // pred_check
      _
    $region23: #{tpu_custom_call.1} parent=1 // pred_check_branch
      %25 = sbr.rel (0) target = $region25
    $region24: #{tpu_custom_call.1} parent=1 // pred_region
      _
    $region25: #{tpu_custom_call.1} parent=1 // pred_fallthru
      _
    // Predicated region
    $region26: #{tpu_custom_call.1} parent=1 // pred_check
      _
    $region27: #{tpu_custom_call.1} parent=1 // pred_check_branch
      %27 = sbr.rel (0) target = $region29
    $region28: #{tpu_custom_call.1} parent=1 // pred_region
      _
    $region29: #{tpu_custom_call.1} parent=1 // pred_fallthru
      _
    %v28 = vld [vmem:[%s2] sm:$0xff]
    %v29 = vld [vmem:[%s3] sm:$0xff]
    %v30 = vld [vmem:[%s4] sm:$0xff]
    %v31 = vld [vmem:[%s5] sm:$0xff]
    %s32 = sld [smem:[#allocation2]]
    %v33 = vld [vmem:[%s0] sm:$0xff]
    %v34 = vld [vmem:[%s1] sm:$0xff]
    %v36 = vcombine.high %v34, %v34
    %vm37 = vcmask 31744
    %v39 = vsel %vm37, %v29, 0
    %vm41 = vcmask 1043456
    %v42 = vsel %vm41, %v34, 0
    %v44 = vsel %vm41, %v36, 0
    %46 = vmatprep.subr.mxu0 0.0
    %47 = vmatpush1.msra.mxu0 0.0
    %48 = vmatprep.subr.mxu0 0.0
    %49 = vmatpush1.msra.mxu0 0.0
    %50 = vmatprep.subr.mxu0 0.0
    %51 = vmatpush1.msra.mxu0 0.0
    %52 = vmatprep.subr.mxu0 0.0
    %53 = vmatpush1.msra.mxu0 0.0
    %54 = vmatprep.subr.mxu0 0.0
    %55 = vmatpush1.msra.mxu0 0.0
    %56 = vmatprep.subr.mxu0 0.0
    %57 = vmatpush1.msra.mxu0 0.0
    %58 = vmatprep.subr.mxu0 0.0
    %59 = vmatpush1.msra.mxu0 0.0
    %60 = vmatprep.subr.mxu0 0.0
    %61 = vmatpush1.msra.mxu0 0.0
    %62 = vmatprep.subr.mxu0 0.0
    %63 = vmatpush1.msra.mxu0 0.0
    %64 = vmatprep.subr.mxu0 0.0
    %65 = vmatpush1.msra.mxu0 0.0
    %66 = vmatprep.subr.mxu0 0.0
    %67 = vmatpush1.msra.mxu0 0.0
    %68 = vmatprep.subr.mxu0 0.0
    %69 = vmatpush1.msra.mxu0 0.0
    %70 = vmatprep.subr.mxu0 0.0
    %71 = vmatpush1.msra.mxu0 0.0
    %72 = vmatprep.subr.mxu0 0.0
    %73 = vmatpush1.msra.mxu0 0.0
    %74 = vmatprep.subr.mxu0 0.0
    %75 = vmatpush1.msra.mxu0 0.0
    %76 = vmatprep.subr.mxu0 %v44
    %77 = vmatpush1.msra.mxu0 %v42
    %78 = vmatprep.subr.mxu0 0.0
    %79 = vmatpush2.msra.mxu0 0.0
    %80 = vmatprep.subr.mxu0 0.0
    %81 = vmatpush2.msra.mxu0 0.0
    %82 = vmatprep.subr.mxu0 0.0
    %83 = vmatpush2.msra.mxu0 0.0
    %84 = vmatprep.subr.mxu0 0.0
    %85 = vmatpush2.msra.mxu0 0.0
    %86 = vmatprep.subr.mxu0 0.0
    %87 = vmatpush2.msra.mxu0 0.0
    %88 = vmatprep.subr.mxu0 0.0
    %89 = vmatpush2.msra.mxu0 0.0
    %90 = vmatprep.subr.mxu0 0.0
    %91 = vmatpush2.msra.mxu0 0.0
    %92 = vmatprep.subr.mxu0 0.0
    %93 = vmatpush2.msra.mxu0 0.0
    %94 = vmatprep.subr.mxu0 0.0
    %95 = vmatpush2.msra.mxu0 0.0
    %96 = vmatprep.subr.mxu0 0.0
    %97 = vmatpush2.msra.mxu0 0.0
    %98 = vmatprep.subr.mxu0 0.0
    %99 = vmatpush2.msra.mxu0 0.0
    %100 = vmatprep.subr.mxu0 0.0
    %101 = vmatpush2.msra.mxu0 0.0
    %102 = vmatprep.subr.mxu0 0.0
    %103 = vmatpush2.msra.mxu0 0.0
    %104 = vmatprep.subr.mxu0 0.0
    %105 = vmatpush2.msra.mxu0 0.0
    %106 = vmatprep.subr.mxu0 0.0
    %107 = vmatpush2.msra.mxu0 0.0
    %108 = vmatprep.subr.mxu0 0.0
    %109 = vmatpush2.msra.mxu0 0.0
    %110 = vmatprep.mubr.f32.mxu0 0.0
    %111 = vmatmul.mubr.f32.gmra.mxu0 %v39
    %v112 = vpop.f32.mrf.mxu0
    %v113 = vadd.f32 0.0, %v112
    %v114 = vpop.f32.mrf.mxu0
    %v115 = vadd.f32 0.0, %v114
    %116 = vdwg.mxu0
    %v118 = vcombine.high %v33, %v33
    %v120 = vsel %vm37, %v28, 0
    %v122 = vsel %vm41, %v33, 0
    %v124 = vsel %vm41, %v118, 0
    %126 = vmatprep.subr.mxu0 0.0
    %127 = vmatpush1.msra.mxu0 0.0
    %128 = vmatprep.subr.mxu0 0.0
    %129 = vmatpush1.msra.mxu0 0.0
    %130 = vmatprep.subr.mxu0 0.0
    %131 = vmatpush1.msra.mxu0 0.0
    %132 = vmatprep.subr.mxu0 0.0
    %133 = vmatpush1.msra.mxu0 0.0
    %134 = vmatprep.subr.mxu0 0.0
    %135 = vmatpush1.msra.mxu0 0.0
    %136 = vmatprep.subr.mxu0 0.0
    %137 = vmatpush1.msra.mxu0 0.0
    %138 = vmatprep.subr.mxu0 0.0
    %139 = vmatpush1.msra.mxu0 0.0
    %140 = vmatprep.subr.mxu0 0.0
    %141 = vmatpush1.msra.mxu0 0.0
    %142 = vmatprep.subr.mxu0 0.0
    %143 = vmatpush1.msra.mxu0 0.0
    %144 = vmatprep.subr.mxu0 0.0
    %145 = vmatpush1.msra.mxu0 0.0
    %146 = vmatprep.subr.mxu0 0.0
    %147 = vmatpush1.msra.mxu0 0.0
    %148 = vmatprep.subr.mxu0 0.0
    %149 = vmatpush1.msra.mxu0 0.0
    %150 = vmatprep.subr.mxu0 0.0
    %151 = vmatpush1.msra.mxu0 0.0
    %152 = vmatprep.subr.mxu0 0.0
    %153 = vmatpush1.msra.mxu0 0.0
    %154 = vmatprep.subr.mxu0 0.0
    %155 = vmatpush1.msra.mxu0 0.0
    %156 = vmatprep.subr.mxu0 %v124
    %157 = vmatpush1.msra.mxu0 %v122
    %158 = vmatprep.subr.mxu0 0.0
    %159 = vmatpush2.msra.mxu0 0.0
    %160 = vmatprep.subr.mxu0 0.0
    %161 = vmatpush2.msra.mxu0 0.0
    %162 = vmatprep.subr.mxu0 0.0
    %163 = vmatpush2.msra.mxu0 0.0
    %164 = vmatprep.subr.mxu0 0.0
    %165 = vmatpush2.msra.mxu0 0.0
    %166 = vmatprep.subr.mxu0 0.0
    %167 = vmatpush2.msra.mxu0 0.0
    %168 = vmatprep.subr.mxu0 0.0
    %169 = vmatpush2.msra.mxu0 0.0
    %170 = vmatprep.subr.mxu0 0.0
    %171 = vmatpush2.msra.mxu0 0.0
    %172 = vmatprep.subr.mxu0 0.0
    %173 = vmatpush2.msra.mxu0 0.0
    %174 = vmatprep.subr.mxu0 0.0
    %175 = vmatpush2.msra.mxu0 0.0
    %176 = vmatprep.subr.mxu0 0.0
    %177 = vmatpush2.msra.mxu0 0.0
    %178 = vmatprep.subr.mxu0 0.0
    %179 = vmatpush2.msra.mxu0 0.0
    %180 = vmatprep.subr.mxu0 0.0
    %181 = vmatpush2.msra.mxu0 0.0
    %182 = vmatprep.subr.mxu0 0.0
    %183 = vmatpush2.msra.mxu0 0.0
    %184 = vmatprep.subr.mxu0 0.0
    %185 = vmatpush2.msra.mxu0 0.0
    %186 = vmatprep.subr.mxu0 0.0
    %187 = vmatpush2.msra.mxu0 0.0
    %188 = vmatprep.subr.mxu0 0.0
    %189 = vmatpush2.msra.mxu0 0.0
    %190 = vmatprep.mubr.f32.mxu0 0.0
    %191 = vmatmul.mubr.f32.gmra.mxu0 %v120
    %v192 = vpop.f32.mrf.mxu0
    %v193 = vadd.f32 %v113, %v192
    %v194 = vpop.f32.mrf.mxu0
    %v195 = vadd.f32 %v115, %v194
    %196 = vdwg.mxu0
    %198 = vset.pattern.permute.xlu0 0
    %199 = vperm.xlu0 %198, %v30
    %v200 = vpop.permute.xlu0 %199
    %v202 = vadd.f32 %v193, %v200
    %v203 = vadd.f32 %v195, %v200
    %v204 = vmax.f32 %v202, 0.0
    %v205 = vmax.f32 %v203, 0.0
    %207 = vset.pattern.permute.xlu0 0
    %208 = vperm.xlu0 %207, %v31
    %v209 = vpop.permute.xlu0 %208
    %v211 = vmul.f32 %v204, %v209
    %v212 = vmul.f32 %v205, %v209
    %v213 = vrot.slane %v211, 4
    %v214 = vadd.f32 %v211, %v213
    %v215 = vrot.slane %v214, 2
    %v216 = vadd.f32 %v214, %v215
    %v217 = vrot.slane %v216, 1
    %v218 = vadd.f32 %v216, %v217
    %v219 = vrot.slane %v212, 4
    %v220 = vadd.f32 %v212, %v219
    %v221 = vrot.slane %v220, 2
    %v222 = vadd.f32 %v220, %v221
    %v223 = vrot.slane %v222, 1
    %v224 = vadd.f32 %v222, %v223
    %v225 = vstv %s32
    %v226 = vadd.f32 %v218, %v225
    %v227 = vadd.f32 %v224, %v225
    %v228 = vxor.u32 %v226, 2147483648
    %v229 = vxor.u32 %v227, 2147483648
    %v230 = vmul.f32 %v228, 1.442695
    %v231 = vpow.pop %v230
    %v232 = vmul.f32 %v229, 1.442695
    %v233 = vpow.pop %v232
    %v234 = vadd.f32 %v231, 1.0
    %v235 = vadd.f32 %v233, 1.0
    %v236 = vrcp.pop %v234
    %v237 = vmul.f32 1.0, %v236
    %v238 = vrcp.pop %v235
    %v239 = vmul.f32 1.0, %v238
    %v242 = vcombine.low %v237, %v239
    %v244 = vmul.f32 %v34, %v242
    %245 = vst [vmem:[#allocation3] sm:$0xff] %v244
    %s246 = scalar_lea.vmem %s0, 8
    %v247 = vld [vmem:[%s246] sm:$0xff]
    %s248 = scalar_lea.vmem %s1, 8
    %v249 = vld [vmem:[%s248] sm:$0xff]
    %v251 = vcombine.high %v249, %v249
    %v252 = vsel %vm41, %v249, 0
    %v254 = vsel %vm41, %v251, 0
    %256 = vmatprep.subr.mxu0 0.0
    %257 = vmatpush1.msra.mxu0 0.0
    %258 = vmatprep.subr.mxu0 0.0
    %259 = vmatpush1.msra.mxu0 0.0
    %260 = vmatprep.subr.mxu0 0.0
    %261 = vmatpush1.msra.mxu0 0.0
    %262 = vmatprep.subr.mxu0 0.0
    %263 = vmatpush1.msra.mxu0 0.0
    %264 = vmatprep.subr.mxu0 0.0
    %265 = vmatpush1.msra.mxu0 0.0
    %266 = vmatprep.subr.mxu0 0.0
    %267 = vmatpush1.msra.mxu0 0.0
    %268 = vmatprep.subr.mxu0 0.0
    %269 = vmatpush1.msra.mxu0 0.0
    %270 = vmatprep.subr.mxu0 0.0
    %271 = vmatpush1.msra.mxu0 0.0
    %272 = vmatprep.subr.mxu0 0.0
    %273 = vmatpush1.msra.mxu0 0.0
    %274 = vmatprep.subr.mxu0 0.0
    %275 = vmatpush1.msra.mxu0 0.0
    %276 = vmatprep.subr.mxu0 0.0
    %277 = vmatpush1.msra.mxu0 0.0
    %278 = vmatprep.subr.mxu0 0.0
    %279 = vmatpush1.msra.mxu0 0.0
    %280 = vmatprep.subr.mxu0 0.0
    %281 = vmatpush1.msra.mxu0 0.0
    %282 = vmatprep.subr.mxu0 0.0
    %283 = vmatpush1.msra.mxu0 0.0
    %284 = vmatprep.subr.mxu0 0.0
    %285 = vmatpush1.msra.mxu0 0.0
    %286 = vmatprep.subr.mxu0 %v254
    %287 = vmatpush1.msra.mxu0 %v252
    %288 = vmatprep.subr.mxu0 0.0
    %289 = vmatpush2.msra.mxu0 0.0
    %290 = vmatprep.subr.mxu0 0.0
    %291 = vmatpush2.msra.mxu0 0.0
    %292 = vmatprep.subr.mxu0 0.0
    %293 = vmatpush2.msra.mxu0 0.0
    %294 = vmatprep.subr.mxu0 0.0
    %295 = vmatpush2.msra.mxu0 0.0
    %296 = vmatprep.subr.mxu0 0.0
    %297 = vmatpush2.msra.mxu0 0.0
    %298 = vmatprep.subr.mxu0 0.0
    %299 = vmatpush2.msra.mxu0 0.0
    %300 = vmatprep.subr.mxu0 0.0
    %301 = vmatpush2.msra.mxu0 0.0
    %302 = vmatprep.subr.mxu0 0.0
    %303 = vmatpush2.msra.mxu0 0.0
    %304 = vmatprep.subr.mxu0 0.0
    %305 = vmatpush2.msra.mxu0 0.0
    %306 = vmatprep.subr.mxu0 0.0
    %307 = vmatpush2.msra.mxu0 0.0
    %308 = vmatprep.subr.mxu0 0.0
    %309 = vmatpush2.msra.mxu0 0.0
    %310 = vmatprep.subr.mxu0 0.0
    %311 = vmatpush2.msra.mxu0 0.0
    %312 = vmatprep.subr.mxu0 0.0
    %313 = vmatpush2.msra.mxu0 0.0
    %314 = vmatprep.subr.mxu0 0.0
    %315 = vmatpush2.msra.mxu0 0.0
    %316 = vmatprep.subr.mxu0 0.0
    %317 = vmatpush2.msra.mxu0 0.0
    %318 = vmatprep.subr.mxu0 0.0
    %319 = vmatpush2.msra.mxu0 0.0
    %320 = vmatprep.mubr.f32.mxu0 0.0
    %321 = vmatmul.mubr.f32.gmra.mxu0 %v39
    %v322 = vpop.f32.mrf.mxu0
    %v323 = vadd.f32 0.0, %v322
    %v324 = vpop.f32.mrf.mxu0
    %v325 = vadd.f32 0.0, %v324
    %326 = vdwg.mxu0
    %v328 = vcombine.high %v247, %v247
    %v329 = vsel %vm41, %v247, 0
    %v331 = vsel %vm41, %v328, 0
    %333 = vmatprep.subr.mxu0 0.0
    %334 = vmatpush1.msra.mxu0 0.0
    %335 = vmatprep.subr.mxu0 0.0
    %336 = vmatpush1.msra.mxu0 0.0
    %337 = vmatprep.subr.mxu0 0.0
    %338 = vmatpush1.msra.mxu0 0.0
    %339 = vmatprep.subr.mxu0 0.0
    %340 = vmatpush1.msra.mxu0 0.0
    %341 = vmatprep.subr.mxu0 0.0
    %342 = vmatpush1.msra.mxu0 0.0
    %343 = vmatprep.subr.mxu0 0.0
    %344 = vmatpush1.msra.mxu0 0.0
    %345 = vmatprep.subr.mxu0 0.0
    %346 = vmatpush1.msra.mxu0 0.0
    %347 = vmatprep.subr.mxu0 0.0
    %348 = vmatpush1.msra.mxu0 0.0
    %349 = vmatprep.subr.mxu0 0.0
    %350 = vmatpush1.msra.mxu0 0.0
    %351 = vmatprep.subr.mxu0 0.0
    %352 = vmatpush1.msra.mxu0 0.0
    %353 = vmatprep.subr.mxu0 0.0
    %354 = vmatpush1.msra.mxu0 0.0
    %355 = vmatprep.subr.mxu0 0.0
    %356 = vmatpush1.msra.mxu0 0.0
    %357 = vmatprep.subr.mxu0 0.0
    %358 = vmatpush1.msra.mxu0 0.0
    %359 = vmatprep.subr.mxu0 0.0
    %360 = vmatpush1.msra.mxu0 0.0
    %361 = vmatprep.subr.mxu0 0.0
    %362 = vmatpush1.msra.mxu0 0.0
    %363 = vmatprep.subr.mxu0 %v331
    %364 = vmatpush1.msra.mxu0 %v329
    %365 = vmatprep.subr.mxu0 0.0
    %366 = vmatpush2.msra.mxu0 0.0
    %367 = vmatprep.subr.mxu0 0.0
    %368 = vmatpush2.msra.mxu0 0.0
    %369 = vmatprep.subr.mxu0 0.0
    %370 = vmatpush2.msra.mxu0 0.0
    %371 = vmatprep.subr.mxu0 0.0
    %372 = vmatpush2.msra.mxu0 0.0
    %373 = vmatprep.subr.mxu0 0.0
    %374 = vmatpush2.msra.mxu0 0.0
    %375 = vmatprep.subr.mxu0 0.0
    %376 = vmatpush2.msra.mxu0 0.0
    %377 = vmatprep.subr.mxu0 0.0
    %378 = vmatpush2.msra.mxu0 0.0
    %379 = vmatprep.subr.mxu0 0.0
    %380 = vmatpush2.msra.mxu0 0.0
    %381 = vmatprep.subr.mxu0 0.0
    %382 = vmatpush2.msra.mxu0 0.0
    %383 = vmatprep.subr.mxu0 0.0
    %384 = vmatpush2.msra.mxu0 0.0
    %385 = vmatprep.subr.mxu0 0.0
    %386 = vmatpush2.msra.mxu0 0.0
    %387 = vmatprep.subr.mxu0 0.0
    %388 = vmatpush2.msra.mxu0 0.0
    %389 = vmatprep.subr.mxu0 0.0
    %390 = vmatpush2.msra.mxu0 0.0
    %391 = vmatprep.subr.mxu0 0.0
    %392 = vmatpush2.msra.mxu0 0.0
    %393 = vmatprep.subr.mxu0 0.0
    %394 = vmatpush2.msra.mxu0 0.0
    %395 = vmatprep.subr.mxu0 0.0
    %396 = vmatpush2.msra.mxu0 0.0
    %397 = vmatprep.mubr.f32.mxu0 0.0
    %398 = vmatmul.mubr.f32.gmra.mxu0 %v120
    %v399 = vpop.f32.mrf.mxu0
    %v400 = vadd.f32 %v323, %v399
    %v401 = vpop.f32.mrf.mxu0
    %v402 = vadd.f32 %v325, %v401
    %403 = vdwg.mxu0
    %v404 = vadd.f32 %v400, %v200
    %v405 = vadd.f32 %v402, %v200
    %v406 = vmax.f32 %v404, 0.0
    %v407 = vmax.f32 %v405, 0.0
    %v408 = vmul.f32 %v406, %v209
    %v409 = vmul.f32 %v407, %v209
    %v410 = vrot.slane %v408, 4
    %v411 = vadd.f32 %v408, %v410
    %v412 = vrot.slane %v411, 2
    %v413 = vadd.f32 %v411, %v412
    %v414 = vrot.slane %v413, 1
    %v415 = vadd.f32 %v413, %v414
    %v416 = vrot.slane %v409, 4
    %v417 = vadd.f32 %v409, %v416
    %v418 = vrot.slane %v417, 2
    %v419 = vadd.f32 %v417, %v418
    %v420 = vrot.slane %v419, 1
    %v421 = vadd.f32 %v419, %v420
    %v422 = vadd.f32 %v415, %v225
    %v423 = vadd.f32 %v421, %v225
    %v424 = vxor.u32 %v422, 2147483648
    %v425 = vxor.u32 %v423, 2147483648
    %v426 = vmul.f32 %v424, 1.442695
    %v427 = vpow.pop %v426
    %v428 = vmul.f32 %v425, 1.442695
    %v429 = vpow.pop %v428
    %v430 = vadd.f32 %v427, 1.0
    %v431 = vadd.f32 %v429, 1.0
    %v432 = vrcp.pop %v430
    %v433 = vmul.f32 1.0, %v432
    %v434 = vrcp.pop %v431
    %v435 = vmul.f32 1.0, %v434
    %v438 = vcombine.low %v433, %v435
    %v440 = vmul.f32 %v249, %v438
    %s441 = scalar_lea.vmem [#allocation3], 8
    %442 = vst [vmem:[%s441] sm:$0xff] %v440
    // Predicated region
    $region30: #{tpu_custom_call.1} parent=1 // pred_check
      _
    $region31: #{tpu_custom_call.1} parent=1 // pred_check_branch
      %444 = sbr.rel (0) target = $region33
    $region32: #{tpu_custom_call.1} parent=1 // pred_region
      %s446 = ssub.s32 256, 256
      %447 = vsyncadd [#allocation4], %s446
      %s448 = sshll.u32 [#allocation3], 4
      %s449 = int_to_ptr.vmem [resolvable:$true] %s448
      %454 = dma.vmem_to_hbm [thread:$0]  %s449, 256, %s7, [#allocation4], 128, 128, 8
    $region33: #{tpu_custom_call.1} parent=1 // pred_fallthru
      _
    // Predicated region
    $region34: #{tpu_custom_call.1} parent=1 // pred_check
      _
    $region35: #{tpu_custom_call.1} parent=1 // pred_check_branch
      %456 = sbr.rel (0) target = $region37
    $region36: #{tpu_custom_call.1} parent=1 // pred_region
      %457 = dma.done [#allocation4], 256
    $region37: #{tpu_custom_call.1} parent=1 // pred_fallthru
      _
    %458 = vsyncpa [#allocation4], 1

</llo_original>
